<compile_context>
chip_gen: v5e
topology: v5e:2x2
jax: 0.10.0
libtpu: 0.0.40
codegen_flags: <defaults>
</compile_context>

<pallas_src>
import jax
import jax.numpy as jnp
from jax.experimental import pallas as pl
from jax.experimental.pallas import tpu as pltpu

LANES = 128
TARGET_BLOCK_BYTES = 4 * 1024 * 1024   # both inputs combined, per grid step
N_CORES = 2                            # megacore sharding on v7x; neutral on 1-TC chips


def _cdiv(a, b):
    return -(-a // b)


def _round_up(x, m):
    return _cdiv(x, m) * m


def _round_down(x, m):
    return (x // m) * m


def _sublane_multiple(dtype):
    # Native sublane tiling: f32 -> 8, bf16 -> 16, int8/fp8 -> 32.
    return max(8, 32 // jnp.dtype(dtype).itemsize)


def _elementwise_terms(p, g):
    """Per-element focal-loss term and positive indicator (f32 in, f32 out)."""
    pos_mask = g == 1.0
    one_m_p = 1.0 - p
    one_m_g = 1.0 - g
    w2 = one_m_g * one_m_g
    neg_w = w2 * w2                                   # (1 - gt)^4, beta = 4
    # Single EUP log per element; the select picks the live branch.
    logp = jnp.log(jnp.where(pos_mask, p, one_m_p))
    weight = jnp.where(pos_mask, one_m_p * one_m_p,   # alpha = 2
                       jnp.where(g < 1.0, (p * p) * neg_w, 0.0))
    return logp * weight, pos_mask.astype(jnp.float32)


def _focal_loss_pallas(pred2d, gt2d, rows, sub):
    """Sums focal-loss terms and positive count over a (rows, 128) slab."""
    bytes_per_row = LANES * (jnp.dtype(pred2d.dtype).itemsize +
                             jnp.dtype(gt2d.dtype).itemsize)
    target_rows = _round_up(max(sub, TARGET_BLOCK_BYTES // bytes_per_row), sub)
    tile_rows = min(target_rows, _round_down(rows, sub))
    sub_tiles = tile_rows // 8

    n_tiles = _cdiv(rows, tile_rows)
    n_cores = N_CORES if n_tiles >= N_CORES else 1
    steps = _cdiv(n_tiles, n_cores)

    ragged_rows = (n_tiles * tile_rows != rows)       # last tile partially valid
    dup_tiles = (n_cores * steps != n_tiles)          # clamped duplicate tiles

    def kernel(pred_ref, gt_ref, loss_out, npos_out, loss_acc, npos_acc):
        c = pl.program_id(0)
        s = pl.program_id(1)

        @pl.when(s == 0)
        def _init():
            loss_acc[...] = jnp.zeros_like(loss_acc)
            npos_acc[...] = jnp.zeros_like(npos_acc)

        def accumulate(mask_last_tile):
            p = pred_ref[...].astype(jnp.float32)
            g = gt_ref[...].astype(jnp.float32)
            if mask_last_tile:
                # Only runs on the single ragged tile: validity is a pure
                # row-index compare (every row below `rows` is fully lane-valid).
                row_idx = jax.lax.broadcasted_iota(jnp.int32, p.shape, 0)
                valid = ((n_tiles - 1) * tile_rows + row_idx) < rows
                # Neutral sentinels: gt=2 -> neither pos nor neg; pred=0.5 keeps log finite.
                g = jnp.where(valid, g, 2.0)
                p = jnp.where(valid, p, 0.5)
            term, pos_f = _elementwise_terms(p, g)
            # (8,128) vreg-sized accumulators: tile-aligned reshape, leading-axis
            # sum lowers to vreg-to-vreg adds (no XLU, no big accumulator RMW).
            loss_acc[...] += term.reshape(sub_tiles, 8, LANES).sum(axis=0)
            npos_acc[...] += pos_f.reshape(sub_tiles, 8, LANES).sum(axis=0)

        def run_tile():
            if ragged_rows:
                is_last = (c * steps + s) == (n_tiles - 1)
                pl.when(is_last)(lambda: accumulate(True))
                pl.when(jnp.logical_not(is_last))(lambda: accumulate(False))
            else:
                accumulate(False)

        if dup_tiles:
            # Duplicated (clamped) tiles: skip the whole body, no per-element mask.
            pl.when((c * steps + s) < n_tiles)(run_tile)
        else:
            run_tile()

        @pl.when(s == pl.num_programs(1) - 1)
        def _fini():
            loss_out[0, :, :] = loss_acc[...]
            npos_out[0, :, :] = npos_acc[...]

    if dup_tiles:
        def in_map(c, s):
            return (jnp.minimum(c * steps + s, n_tiles - 1), 0)
    else:
        def in_map(c, s):
            return (c * steps + s, 0)

    in_spec = pl.BlockSpec((tile_rows, LANES), in_map)
    out_spec = pl.BlockSpec((1, 8, LANES), lambda c, s: (c, 0, 0))
    partial_shape = jax.ShapeDtypeStruct((n_cores, 8, LANES), jnp.float32)

    loss_part, npos_part = pl.pallas_call(
        kernel,
        out_shape=(partial_shape, partial_shape),
        grid_spec=pltpu.PrefetchScalarGridSpec(
            num_scalar_prefetch=0,
            grid=(n_cores, steps),
            in_specs=[in_spec, in_spec],
            out_specs=(out_spec, out_spec),
            scratch_shapes=[pltpu.VMEM((8, LANES), jnp.float32)] * 2,
        ),
        compiler_params=pltpu.CompilerParams(
            dimension_semantics=("parallel", "arbitrary"),
            vmem_limit_bytes=32 * 1024 * 1024,
        ),
    )(pred2d, gt2d)

    return jnp.sum(loss_part), jnp.sum(npos_part)


def focal_loss(pred, gt):
    """pred, gt: same shape (B, C, H, W), pred in (0, 1). Returns scalar f32 loss."""
    assert pred.shape == gt.shape
    total = pred.size

    pred_flat = jnp.ravel(pred)
    gt_flat = jnp.ravel(gt)

    sub = max(_sublane_multiple(pred.dtype), _sublane_multiple(gt.dtype))
    rows = total // LANES

    loss_sum = jnp.zeros((), jnp.float32)
    num_pos = jnp.zeros((), jnp.float32)

    if rows >= sub:
        main = rows * LANES
        if main == total:
            pred2d = pred_flat.reshape(rows, LANES)
            gt2d = gt_flat.reshape(rows, LANES)
        else:
            # No full-array pad: kernel covers the lane-aligned leading slab,
            # the <=127-element tail is handled below with plain jnp.
            pred2d = jax.lax.slice(pred_flat, (0,), (main,)).reshape(rows, LANES)
            gt2d = jax.lax.slice(gt_flat, (0,), (main,)).reshape(rows, LANES)
        loss_k, npos_k = _focal_loss_pallas(pred2d, gt2d, rows, sub)
        loss_sum = loss_sum + loss_k
        num_pos = num_pos + npos_k
        tail_start = main
    else:
        # Tiny input: not worth a kernel launch.
        tail_start = 0

    if tail_start < total:
        p_t = pred_flat[tail_start:].astype(jnp.float32)
        g_t = gt_flat[tail_start:].astype(jnp.float32)
        term_t, pos_t = _elementwise_terms(p_t, g_t)
        loss_sum = loss_sum + jnp.sum(term_t)
        num_pos = num_pos + jnp.sum(pos_t)

    # pos part of loss_sum is exactly 0 when num_pos == 0, so this reproduces
    # the reference's `if num_pos == 0` branch.
    return -loss_sum / jnp.maximum(num_pos, 1.0)


def _reference(pred, gt, alpha=2, beta=4):
    pred = pred.astype(jnp.float32)
    gt = gt.astype(jnp.float32)
    pos_inds = (gt == 1.0).astype(jnp.float32)
    neg_inds = (gt < 1.0).astype(jnp.float32)
    neg_weights = (1.0 - gt) ** beta
    pos_loss = jnp.log(pred) * (1.0 - pred) ** alpha * pos_inds
    neg_loss = jnp.log(1.0 - pred) * pred ** alpha * neg_weights * neg_inds
    num_pos = pos_inds.sum()
    pos_loss = pos_loss.sum()
    neg_loss = neg_loss.sum()
    safe_den = jnp.where(num_pos == 0, 1.0, num_pos)
    return jnp.where(num_pos == 0, -neg_loss, -(pos_loss + neg_loss) / safe_den)


if __name__ == "__main__":
    key = jax.random.PRNGKey(0)
    k1, k2, k3 = jax.random.split(key, 3)

    B, C, H, W = 2, 4, 16, 16  # NCHW
    # pred: sigmoid-squashed logits -> strictly in (0, 1)
    pred = jax.nn.sigmoid(jax.random.normal(k1, (B, C, H, W), jnp.float32))
    # gt: mostly soft targets in [0, 1), with a few exact 1.0 "positive" peaks
    gt_soft = jax.random.uniform(k2, (B, C, H, W), jnp.float32, 0.0, 0.9)
    peak_mask = jax.random.uniform(k3, (B, C, H, W)) > 0.97
    gt = jnp.where(peak_mask, 1.0, gt_soft)

    loss = jax.jit(focal_loss)(pred, gt)
    loss = jax.block_until_ready(loss)

    ref = _reference(pred, gt)
    assert jnp.allclose(loss, ref, rtol=1e-5, atol=1e-5), (loss, ref)

    print("KERNEL_OK")
</pallas_src>

<mosaic_0001>
module attributes {stable_mosaic.version = 11 : i64} {
  func.func @kernel(%arg0: i32, %arg1: i32, %arg2: memref<16x128xf32, #tpu.memory_space<vmem>>, %arg3: memref<16x128xf32, #tpu.memory_space<vmem>>, %arg4: memref<1x8x128xf32, #tpu.memory_space<vmem>>, %arg5: memref<1x8x128xf32, #tpu.memory_space<vmem>>, %arg6: memref<8x128xf32, #tpu.memory_space<vmem>>, %arg7: memref<8x128xf32, #tpu.memory_space<vmem>>) attributes {dimension_semantics = [#tpu.dimension_semantics<parallel>, #tpu.dimension_semantics<arbitrary>], iteration_bounds = array<i64: 1, 1>, scalar_prefetch = 0 : i64, scratch_operands = 2 : i64, tpu.core_type = #tpu.core_type<tc>, window_params = [{transform_indices = @transform_0, window_bounds = array<i64: 16, 128>}, {transform_indices = @transform_1, window_bounds = array<i64: 16, 128>}, {transform_indices = @transform_2, window_bounds = array<i64: 1, 8, 128>}, {transform_indices = @transform_3, window_bounds = array<i64: 1, 8, 128>}]} {
    %c0_i32 = arith.constant 0 : i32
    %0 = arith.cmpi eq, %arg1, %c0_i32 : i32
    %1 = arith.extui %0 : i1 to i32
    %c0_i32_0 = arith.constant 0 : i32
    %2 = arith.cmpi ne, %1, %c0_i32_0 : i32
    scf.if %2 {
      %cst_20 = arith.constant 0.000000e+00 : f32
      %39 = vector.broadcast %cst_20 : f32 to vector<8x128xf32>
      %c0_21 = arith.constant 0 : index
      %c0_22 = arith.constant 0 : index
      %40 = vector.load %arg6[%c0_21, %c0_22] : memref<8x128xf32, #tpu.memory_space<vmem>>, vector<8x128xf32>
      tpu.vector_store %arg6[%c0_21, %c0_22], %39 {strides = array<i32>} : memref<8x128xf32, #tpu.memory_space<vmem>>, vector<8x128xf32>,
      %cst_23 = arith.constant 0.000000e+00 : f32
      %41 = vector.broadcast %cst_23 : f32 to vector<8x128xf32>
      %c0_24 = arith.constant 0 : index
      %c0_25 = arith.constant 0 : index
      %42 = vector.load %arg7[%c0_24, %c0_25] : memref<8x128xf32, #tpu.memory_space<vmem>>, vector<8x128xf32>
      tpu.vector_store %arg7[%c0_24, %c0_25], %41 {strides = array<i32>} : memref<8x128xf32, #tpu.memory_space<vmem>>, vector<8x128xf32>,
    } else {
    }
    %c0 = arith.constant 0 : index
    %c0_1 = arith.constant 0 : index
    %3 = vector.load %arg2[%c0, %c0_1] : memref<16x128xf32, #tpu.memory_space<vmem>>, vector<16x128xf32>
    %c0_2 = arith.constant 0 : index
    %c0_3 = arith.constant 0 : index
    %4 = vector.load %arg3[%c0_2, %c0_3] : memref<16x128xf32, #tpu.memory_space<vmem>>, vector<16x128xf32>
    %cst = arith.constant 1.000000e+00 : f32
    %5 = vector.broadcast %cst : f32 to vector<16x128xf32>
    %6 = arith.cmpf oeq, %4, %5 : vector<16x128xf32>
    %cst_4 = arith.constant 1.000000e+00 : f32
    %7 = vector.broadcast %cst_4 : f32 to vector<16x128xf32>
    %8 = arith.subf %7, %3 : vector<16x128xf32>
    %cst_5 = arith.constant 1.000000e+00 : f32
    %9 = vector.broadcast %cst_5 : f32 to vector<16x128xf32>
    %10 = arith.subf %9, %4 : vector<16x128xf32>
    %11 = arith.mulf %10, %10 : vector<16x128xf32>
    %12 = arith.mulf %11, %11 : vector<16x128xf32>
    %13 = arith.select %6, %3, %8 : vector<16x128xi1>, vector<16x128xf32>
    %14 = math.log %13 : vector<16x128xf32>
    %15 = arith.mulf %8, %8 : vector<16x128xf32>
    %cst_6 = arith.constant 1.000000e+00 : f32
    %16 = vector.broadcast %cst_6 : f32 to vector<16x128xf32>
    %17 = arith.cmpf olt, %4, %16 : vector<16x128xf32>
    %18 = arith.mulf %3, %3 : vector<16x128xf32>
    %19 = arith.mulf %18, %12 : vector<16x128xf32>
    %cst_7 = arith.constant 0.000000e+00 : f32
    %20 = vector.broadcast %cst_7 : f32 to vector<16x128xf32>
    %21 = arith.select %17, %19, %20 : vector<16x128xi1>, vector<16x128xf32>
    %22 = arith.select %6, %15, %21 : vector<16x128xi1>, vector<16x128xf32>
    %23 = arith.mulf %14, %22 : vector<16x128xf32>
    %24 = arith.extui %6 : vector<16x128xi1> to vector<16x128xi32>
    %25 = arith.sitofp %24 : vector<16x128xi32> to vector<16x128xf32>
    %c0_8 = arith.constant 0 : index
    %c0_9 = arith.constant 0 : index
    %26 = vector.load %arg6[%c0_8, %c0_9] : memref<8x128xf32, #tpu.memory_space<vmem>>, vector<8x128xf32>
    %27 = vector.shape_cast %23 : vector<16x128xf32> to vector<2x8x128xf32>
    %cst_10 = arith.constant dense<0.000000e+00> : vector<8x128xf32>
    %28 = vector.multi_reduction <add>, %27, %cst_10 [0] : vector<2x8x128xf32> to vector<8x128xf32>
    %29 = arith.addf %26, %28 : vector<8x128xf32>
    %c0_11 = arith.constant 0 : index
    %c0_12 = arith.constant 0 : index
    %30 = vector.load %arg6[%c0_11, %c0_12] : memref<8x128xf32, #tpu.memory_space<vmem>>, vector<8x128xf32>
    tpu.vector_store %arg6[%c0_11, %c0_12], %29 {strides = array<i32>} : memref<8x128xf32, #tpu.memory_space<vmem>>, vector<8x128xf32>,
    %c0_13 = arith.constant 0 : index
    %c0_14 = arith.constant 0 : index
    %31 = vector.load %arg7[%c0_13, %c0_14] : memref<8x128xf32, #tpu.memory_space<vmem>>, vector<8x128xf32>
    %32 = vector.shape_cast %25 : vector<16x128xf32> to vector<2x8x128xf32>
    %cst_15 = arith.constant dense<0.000000e+00> : vector<8x128xf32>
    %33 = vector.multi_reduction <add>, %32, %cst_15 [0] : vector<2x8x128xf32> to vector<8x128xf32>
    %34 = arith.addf %31, %33 : vector<8x128xf32>
    %c0_16 = arith.constant 0 : index
    %c0_17 = arith.constant 0 : index
    %35 = vector.load %arg7[%c0_16, %c0_17] : memref<8x128xf32, #tpu.memory_space<vmem>>, vector<8x128xf32>
    tpu.vector_store %arg7[%c0_16, %c0_17], %34 {strides = array<i32>} : memref<8x128xf32, #tpu.memory_space<vmem>>, vector<8x128xf32>,
    %c0_i32_18 = arith.constant 0 : i32
    %36 = arith.cmpi eq, %arg1, %c0_i32_18 : i32
    %37 = arith.extui %36 : i1 to i32
    %c0_i32_19 = arith.constant 0 : i32
    %38 = arith.cmpi ne, %37, %c0_i32_19 : i32
    scf.if %38 {
      %c0_20 = arith.constant 0 : index
      %c0_21 = arith.constant 0 : index
      %39 = vector.load %arg6[%c0_20, %c0_21] : memref<8x128xf32, #tpu.memory_space<vmem>>, vector<8x128xf32>
      %c0_22 = arith.constant 0 : index
      %c0_23 = arith.constant 0 : index
      %c0_24 = arith.constant 0 : index
      %40 = vector.load %arg4[%c0_22, %c0_23, %c0_24] : memref<1x8x128xf32, #tpu.memory_space<vmem>>, vector<1x8x128xf32>
      %41 = vector.shape_cast %40 : vector<1x8x128xf32> to vector<8x128xf32>
      %42 = vector.shape_cast %39 : vector<8x128xf32> to vector<1x8x128xf32>
      tpu.vector_store %arg4[%c0_22, %c0_23, %c0_24], %42 {strides = array<i32>} : memref<1x8x128xf32, #tpu.memory_space<vmem>>, vector<1x8x128xf32>,
      %c0_25 = arith.constant 0 : index
      %c0_26 = arith.constant 0 : index
      %43 = vector.load %arg7[%c0_25, %c0_26] : memref<8x128xf32, #tpu.memory_space<vmem>>, vector<8x128xf32>
      %c0_27 = arith.constant 0 : index
      %c0_28 = arith.constant 0 : index
      %c0_29 = arith.constant 0 : index
      %44 = vector.load %arg5[%c0_27, %c0_28, %c0_29] : memref<1x8x128xf32, #tpu.memory_space<vmem>>, vector<1x8x128xf32>
      %45 = vector.shape_cast %44 : vector<1x8x128xf32> to vector<8x128xf32>
      %46 = vector.shape_cast %43 : vector<8x128xf32> to vector<1x8x128xf32>
      tpu.vector_store %arg5[%c0_27, %c0_28, %c0_29], %46 {strides = array<i32>} : memref<1x8x128xf32, #tpu.memory_space<vmem>>, vector<1x8x128xf32>,
    } else {
    }
    return
  }
  func.func @transform_0(%arg0: i32, %arg1: i32) -> (i32, i32) {
    %c1_i32 = arith.constant 1 : i32
    %0 = arith.muli %arg0, %c1_i32 : i32
    %1 = arith.addi %0, %arg1 : i32
    %c0_i32 = arith.constant 0 : i32
    %c0_i32_0 = arith.constant 0 : i32
    return %1, %c0_i32 : i32, i32
  }
  func.func @transform_1(%arg0: i32, %arg1: i32) -> (i32, i32) {
    %c1_i32 = arith.constant 1 : i32
    %0 = arith.muli %arg0, %c1_i32 : i32
    %1 = arith.addi %0, %arg1 : i32
    %c0_i32 = arith.constant 0 : i32
    %c0_i32_0 = arith.constant 0 : i32
    return %1, %c0_i32 : i32, i32
  }
  func.func @transform_2(%arg0: i32, %arg1: i32) -> (i32, i32, i32) {
    %c0_i32 = arith.constant 0 : i32
    %c0_i32_0 = arith.constant 0 : i32
    %c0_i32_1 = arith.constant 0 : i32
    return %arg0, %c0_i32, %c0_i32_0 : i32, i32, i32
  }
  func.func @transform_3(%arg0: i32, %arg1: i32) -> (i32, i32, i32) {
    %c0_i32 = arith.constant 0 : i32
    %c0_i32_0 = arith.constant 0 : i32
    %c0_i32_1 = arith.constant 0 : i32
    return %arg0, %c0_i32, %c0_i32_0 : i32, i32, i32
  }
}

</mosaic_0001>

<llo_original>
// kernel: focal_loss.1
$region0: #{focal_loss.1}
  #allocation0 [shape = 'u32[]', space=smem, size = 0x4, offset = 0x4, fixed_abs, tag = 'smem constant byte address 0x4 - core index']
  #allocation1 [shape = 'u32[72,128]{1,0:T(1,128)}', space=vmem, size = 0x9000, scoped, tag = 'internal scratch']
  #allocation2 [shape = 'f32[8,128]{1,0:T(8,128)}', space=vmem, size = 0x1000, scoped, tag = 'scratch operand']
  #allocation3 [shape = 'f32[8,128]{1,0:T(8,128)}', space=vmem, size = 0x1000, scoped, tag = 'scratch operand']
  %s0 = inlined_call_operand.vmem [shape: f32[16,128], index: 0, kind: input, shape index: {}]
  %s1 = inlined_call_operand.vmem [shape: f32[16,128], index: 1, kind: input, shape index: {}]
  %s2 = inlined_call_operand.vmem [shape: f32[1,8,128], index: 2, kind: output, shape index: {0}]
  %s3 = inlined_call_operand.vmem [shape: f32[1,8,128], index: 3, kind: output, shape index: {1}]
  %4 = xla_tuple %s2, %s3
  %s5 = sld [smem:[#allocation0]]
  $region34: #{focal_loss.1} parent=0
    _
  %s7 = ssub.s32 1, %s5
  %s8 = scalar_select 0, %s7, %s5
  // Predicated region
  $region2: #{focal_loss.1} parent=0 // pred_check
    _
  $region3: #{focal_loss.1} parent=0 // pred_check_branch
    %10 = sbr.rel (0) target = $region5
  $region4: #{focal_loss.1} parent=0 // pred_region
    %s11 = sadd.s32 0, 0
    %s12 = smul.u32 2, %s11
    %p13 = scmp.lt.s32.totalorder %s12, 1
    %s14 = scalar_select %p13, %s12, 1
    %s15 = smul.addr %s14, 8
    %s16 = scalar_lea.vmem %s0, %s15
    %s17 = sadd.s32 0, 0
    %s18 = smul.u32 2, %s17
  $region5: #{focal_loss.1} parent=0 // pred_fallthru
    _
  // Predicated region
  $region6: #{focal_loss.1} parent=0 // pred_check
    _
  $region7: #{focal_loss.1} parent=0 // pred_check_branch
    %20 = sbr.rel (0) target = $region9
  $region8: #{focal_loss.1} parent=0 // pred_region
    %s21 = sadd.s32 0, 0
    %s22 = smul.u32 2, %s21
    %p23 = scmp.lt.s32.totalorder %s22, 1
    %s24 = scalar_select %p23, %s22, 1
    %s25 = smul.addr %s24, 8
    %s26 = scalar_lea.vmem %s1, %s25
    %s27 = sadd.s32 0, 0
    %s28 = smul.u32 2, %s27
  $region9: #{focal_loss.1} parent=0 // pred_fallthru
    _
  %s29 = sadd.s32 0, 0
  %s30 = smul.u32 2, %s29
  %p31 = scmp.lt.s32.totalorder %s30, 1
  %s32 = scalar_select %p31, %s30, 1
  %s33 = smul.addr %s32, 8
  %s34 = scalar_lea.vmem %s0, %s33
  %s35 = sadd.s32 0, 0
  %s36 = smul.u32 2, %s35
  %p37 = scmp.lt.s32.totalorder %s36, 1
  %s38 = scalar_select %p37, %s36, 1
  %s39 = smul.addr %s38, 8
  %s40 = scalar_lea.vmem %s1, %s39
  %s41 = sadd.s32 0, 0
  %s42 = smul.u32 2, %s41
  %p43 = scmp.lt.s32.totalorder %s42, 1
  %s44 = scalar_select %p43, %s42, 1
  %s45 = smul.addr %s44, 8
  %s46 = scalar_lea.vmem %s0, %s45
  %s47 = sadd.s32 0, 0
  %s48 = smul.u32 2, %s47
  %s49 = sadd.s32 0, 0
  %s50 = smul.u32 2, %s49
  %p51 = scmp.lt.s32.totalorder %s50, 1
  %s52 = scalar_select %p51, %s50, 1
  %s53 = smul.addr %s52, 8
  %s54 = scalar_lea.vmem %s1, %s53
  %s55 = sadd.s32 0, 0
  %s56 = smul.u32 2, %s55
  %p57 = scmp.eq.s32.totalorder 0, 0
  // Predicated region
  $region10: #{focal_loss.1} parent=0 // pred_check
    %p58 = pneg %p57
  $region11: #{focal_loss.1} parent=0 // pred_check_branch
    %60 = sbr.rel (%p58) target = $region13
  $region12: #{focal_loss.1} parent=0 // pred_region
    %61 = vst [vmem:[#allocation2] sm:$0xff] 0.0
    %62 = vst [vmem:[#allocation3] sm:$0xff] 0.0
  $region13: #{focal_loss.1} parent=0 // pred_fallthru
    _
  %v63 = vld [vmem:[%s46] sm:$0xff]
  %v64 = vld [vmem:[%s46 + $0x8] sm:$0xff]
  %v65 = vld [vmem:[%s54] sm:$0xff]
  %v66 = vld [vmem:[%s54 + $0x8] sm:$0xff]
  %vm67 = vcmp.eq.f32.partialorder %v65, 1.0
  %vm68 = vcmp.eq.f32.partialorder %v66, 1.0
  %v69 = vsub.f32 1.0, %v63
  %v70 = vsub.f32 1.0, %v64
  %v71 = vsub.f32 1.0, %v65
  %v72 = vsub.f32 1.0, %v66
  %v73 = vmul.f32 %v71, %v71
  %v74 = vmul.f32 %v72, %v72
  %v75 = vmul.f32 %v73, %v73
  %v76 = vmul.f32 %v74, %v74
  %v77 = vsel %vm67, %v63, %v69
  %v78 = vsel %vm68, %v64, %v70
  %v79 = vlog2.pop %v77
  %v80 = vmul.f32 %v79, 0.6931472
  %v81 = vlog2.pop %v78
  %v82 = vmul.f32 %v81, 0.6931472
  %v83 = vmul.f32 %v69, %v69
  %v84 = vmul.f32 %v70, %v70
  %vm85 = vcmp.lt.f32.partialorder %v65, 1.0
  %vm86 = vcmp.lt.f32.partialorder %v66, 1.0
  %v87 = vmul.f32 %v63, %v63
  %v88 = vmul.f32 %v64, %v64
  %v89 = vmul.f32 %v87, %v75
  %v90 = vmul.f32 %v88, %v76
  %v91 = vsel %vm85, %v89, 0.0
  %v92 = vsel %vm86, %v90, 0.0
  %v93 = vsel %vm67, %v83, %v91
  %v94 = vsel %vm68, %v84, %v92
  %v95 = vmul.f32 %v80, %v93
  %v96 = vmul.f32 %v82, %v94
  %v97 = vsel %vm67, 1, 0
  %v98 = vsel %vm68, 1, 0
  %v99 = vcvt.s32.f32 %v97
  %v100 = vcvt.s32.f32 %v98
  %v101 = vld [vmem:[#allocation2] sm:$0xff]
  %v102 = vadd.f32 %v95, %v96
  %v103 = vadd.f32 %v101, %v102
  %104 = vst [vmem:[#allocation2] sm:$0xff] %v103
  %v105 = vld [vmem:[#allocation3] sm:$0xff]
  %v106 = vadd.f32 %v99, %v100
  %v107 = vadd.f32 %v105, %v106
  %108 = vst [vmem:[#allocation3] sm:$0xff] %v107
  // Predicated region
  $region14: #{focal_loss.1} parent=0 // pred_check
    %p109 = pneg %p57
  $region15: #{focal_loss.1} parent=0 // pred_check_branch
    %111 = sbr.rel (%p109) target = $region17
  $region16: #{focal_loss.1} parent=0 // pred_region
    %v112 = vld [vmem:[#allocation2] sm:$0xff]
    %113 = vst [vmem:[%s2] sm:$0xff] %v112
    %v114 = vld [vmem:[#allocation3] sm:$0xff]
    %115 = vst [vmem:[%s3] sm:$0xff] %v114
  $region17: #{focal_loss.1} parent=0 // pred_fallthru
    _
  // Predicated region
  $region18: #{focal_loss.1} parent=0 // pred_check
    _
  $region19: #{focal_loss.1} parent=0 // pred_check_branch
    %117 = sbr.rel (0) target = $region21
  $region20: #{focal_loss.1} parent=0 // pred_region
    _
  $region21: #{focal_loss.1} parent=0 // pred_fallthru
    _
  // Predicated region
  $region22: #{focal_loss.1} parent=0 // pred_check
    _
  $region23: #{focal_loss.1} parent=0 // pred_check_branch
    %119 = sbr.rel (0) target = $region25
  $region24: #{focal_loss.1} parent=0 // pred_region
    _
  $region25: #{focal_loss.1} parent=0 // pred_fallthru
    _
  // Predicated region
  $region26: #{focal_loss.1} parent=0 // pred_check
    _
  $region27: #{focal_loss.1} parent=0 // pred_check_branch
    %121 = sbr.rel (0) target = $region29
  $region28: #{focal_loss.1} parent=0 // pred_region
    _
  $region29: #{focal_loss.1} parent=0 // pred_fallthru
    _
  // Predicated region
  $region30: #{focal_loss.1} parent=0 // pred_check
    _
  $region31: #{focal_loss.1} parent=0 // pred_check_branch
    %123 = sbr.rel (0) target = $region33
  $region32: #{focal_loss.1} parent=0 // pred_region
    _
  $region33: #{focal_loss.1} parent=0 // pred_fallthru
    _

</llo_original>
